<compile_context>
chip_gen: v7x
topology: tpu7x:2x2x1
jax: 0.10.0
libtpu: 0.0.40
codegen_flags: <defaults>
</compile_context>

<pallas_src>
import jax
import jax.numpy as jnp
from jax.experimental import pallas as pl
from jax.experimental.pallas import tpu as pltpu

_LANE = 128
# Budget for all kernel VMEM (double-buffered blocks + f32 temps).  Fits under
# the 32 MiB scoped default on v6e/v7x, under v7x's 64 MiB physical VMEM, and
# we raise v5e's 16 MiB scoped default explicitly via vmem_limit_bytes.
_VMEM_CAP = 28 * 1024 * 1024
_VMEM_LIMIT_BYTES = 32 * 1024 * 1024


def _compressnet_kernel(x_ref, w_ref, b_ref, o_ref):
    # x_ref: (bt, C, thw) VMEM  -- activations (batch tile x channels x spatial tile)
    # w_ref: (C, 1)       VMEM  -- 1x1 conv weights for the single output channel
    # b_ref: (1,)         SMEM  -- conv bias
    # o_ref: (bt, 1, thw) VMEM  -- output tile (lane-dense last dim)
    x = jnp.maximum(x_ref[...], 0.0)                      # ReLU in input dtype (bf16 VALU ok)
    x = x.astype(jnp.float32)                             # upcast only for the reduce
    w = w_ref[...].astype(jnp.float32)                    # (C, 1)
    acc = jnp.sum(x * w[None, :, :], axis=1, keepdims=True)  # (bt, 1, thw) f32 accumulate
    o_ref[...] = (acc + b_ref[0]).astype(o_ref.dtype)


def _pick_tiles(B, C, HW, itemsize):
    """Pick (batch_tile, spatial_tile) so each grid step moves a few MiB
    (amortizing ~0.35us/step pipeline overhead) while 2x double-buffered
    input/output blocks plus ~3 block-sized f32 temporaries fit _VMEM_CAP."""
    per_group = (2 * C * _LANE * itemsize      # x double buffer
                 + 2 * _LANE * itemsize        # out double buffer
                 + 3 * C * _LANE * 4)          # f32 temps (ReLU / x*w / acc)
    budget = _VMEM_CAP - (2 << 20)             # headroom
    hw_groups = pl.cdiv(HW, _LANE)

    g = max(1, min(hw_groups, budget // per_group))
    thw = g * _LANE

    bt = 1
    if g == hw_groups:                         # whole image fits -> tile batch too
        per_image = g * per_group
        bt = max(1, min(B, budget // per_image))

    # v7x megacore: avoid collapsing a non-trivial workload to a single grid
    # step (one of the two TensorCores would idle).  Tiny inputs stay 1 step.
    if pl.cdiv(B, bt) * pl.cdiv(HW, thw) == 1 and bt * C * thw * itemsize >= (2 << 20):
        if g >= 2:
            g = -(-g // 2)
            thw = g * _LANE
        elif bt >= 2:
            bt = -(-bt // 2)
    return bt, thw


def compressnet_forward(x, weight, bias):
    """x: (B, C, H, W); weight: (1, C, 1, 1); bias: (1,). Returns (B, 1, H, W)."""
    B, C, H, W = x.shape
    HW = H * W
    itemsize = jnp.dtype(x.dtype).itemsize

    w = jnp.asarray(weight, x.dtype).reshape(C, 1)
    b = jnp.asarray(bias, jnp.float32).reshape(1)
    x_flat = x.reshape(B, C, HW)

    bt, thw = _pick_tiles(B, C, HW, itemsize)
    grid = (pl.cdiv(B, bt), pl.cdiv(HW, thw))

    out = pl.pallas_call(
        _compressnet_kernel,
        out_shape=jax.ShapeDtypeStruct((B, 1, HW), x.dtype),
        grid_spec=pltpu.PrefetchScalarGridSpec(
            num_scalar_prefetch=0,
            grid=grid,
            in_specs=[
                pl.BlockSpec((bt, C, thw), lambda bi, si: (bi, 0, si)),
                pl.BlockSpec((C, 1), lambda bi, si: (0, 0)),
                pl.BlockSpec(memory_space=pltpu.MemorySpace.SMEM),
            ],
            out_specs=pl.BlockSpec((bt, 1, thw), lambda bi, si: (bi, 0, si)),
        ),
        compiler_params=pltpu.CompilerParams(
            dimension_semantics=("parallel", "parallel"),
            vmem_limit_bytes=_VMEM_LIMIT_BYTES,
        ),
    )(x_flat, w, b)

    return out.reshape(B, 1, H, W)


def _reference(x, weight, bias):
    # Pure-JAX reference of the module forward (f32 accumulation).
    xr = jnp.maximum(x.astype(jnp.float32), 0.0)
    w = jnp.asarray(weight, jnp.float32).reshape(1, -1, 1, 1)
    out = jnp.sum(xr * w, axis=1, keepdims=True) + jnp.asarray(bias, jnp.float32).reshape(())
    return out.astype(x.dtype)


def _check(B, C, H, W, key):
    kx, kw, kb = jax.random.split(key, 3)
    x = jax.random.normal(kx, (B, C, H, W), dtype=jnp.float32)
    weight = jax.random.normal(kw, (1, C, 1, 1), dtype=jnp.float32) * 0.1
    bias = jax.random.normal(kb, (1,), dtype=jnp.float32) * 0.1

    out = jax.block_until_ready(compressnet_forward(x, weight, bias))
    ref = jax.block_until_ready(_reference(x, weight, bias))

    assert out.shape == (B, 1, H, W), out.shape
    assert jnp.allclose(out, ref, rtol=1e-5, atol=1e-5), float(jnp.max(jnp.abs(out - ref)))


if __name__ == "__main__":
    key = jax.random.PRNGKey(0)
    k0, k1 = jax.random.split(key)

    # fovsimple branch of the config: conv_last = Conv2d(24, 1, kernel_size=1)
    _check(2, 24, 16, 16, k0)   # HW = 256 (exact lane multiple)
    _check(2, 24, 9, 25, k1)    # HW = 225 (exercises edge-block read/write path)

    print("KERNEL_OK")
</pallas_src>

<mosaic_0001>
module attributes {stable_mosaic.version = 11 : i64} {
  func.func @_compressnet_kernel(%arg0: i32, %arg1: i32, %arg2: memref<2x24x256xf32, #tpu.memory_space<vmem>>, %arg3: memref<24x1xf32, #tpu.memory_space<vmem>>, %arg4: memref<1xf32, #tpu.memory_space<smem>>, %arg5: memref<2x1x256xf32, #tpu.memory_space<vmem>>) attributes {dimension_semantics = [#tpu.dimension_semantics<parallel>, #tpu.dimension_semantics<parallel>], iteration_bounds = array<i64: 1, 1>, scalar_prefetch = 0 : i64, scratch_operands = 0 : i64, tpu.core_type = #tpu.core_type<tc>, window_params = [{transform_indices = @transform_0, window_bounds = array<i64: 2, 24, 256>}, {pipeline_mode = #tpu.pipeline_mode<synchronous>, transform_indices = @transform_1, window_bounds = array<i64: 24, 1>}, {transform_indices = @transform_2, window_bounds = array<i64: 1>}, {transform_indices = @transform_3, window_bounds = array<i64: 2, 1, 256>}]} {
    %c0 = arith.constant 0 : index
    %c0_0 = arith.constant 0 : index
    %c0_1 = arith.constant 0 : index
    %0 = vector.load %arg2[%c0, %c0_0, %c0_1] : memref<2x24x256xf32, #tpu.memory_space<vmem>>, vector<2x24x256xf32>
    %cst = arith.constant 0.000000e+00 : f32
    %1 = vector.broadcast %cst : f32 to vector<2x24x256xf32>
    %2 = arith.maximumf %0, %1 : vector<2x24x256xf32>
    %c0_2 = arith.constant 0 : index
    %c0_3 = arith.constant 0 : index
    %3 = vector.load %arg3[%c0_2, %c0_3] : memref<24x1xf32, #tpu.memory_space<vmem>>, vector<24x1xf32>
    %4 = vector.shape_cast %3 : vector<24x1xf32> to vector<1x24x1xf32>
    %5 = vector.broadcast %4 : vector<1x24x1xf32> to vector<2x24x256xf32>
    %6 = arith.mulf %2, %5 : vector<2x24x256xf32>
    %cst_4 = arith.constant dense<0.000000e+00> : vector<2x256xf32>
    %7 = vector.multi_reduction <add>, %6, %cst_4 [1] : vector<2x24x256xf32> to vector<2x256xf32>
    %8 = vector.shape_cast %7 : vector<2x256xf32> to vector<2x1x256xf32>
    %c0_5 = arith.constant 0 : index
    %9 = memref.load %arg4[%c0_5] : memref<1xf32, #tpu.memory_space<smem>>
    %10 = vector.broadcast %9 : f32 to vector<2x1x256xf32>
    %11 = arith.addf %8, %10 : vector<2x1x256xf32>
    %c0_6 = arith.constant 0 : index
    %c0_7 = arith.constant 0 : index
    %c0_8 = arith.constant 0 : index
    %12 = vector.load %arg5[%c0_6, %c0_7, %c0_8] : memref<2x1x256xf32, #tpu.memory_space<vmem>>, vector<2x1x256xf32>
    tpu.vector_store %arg5[%c0_6, %c0_7, %c0_8], %11 {strides = array<i32>} : memref<2x1x256xf32, #tpu.memory_space<vmem>>, vector<2x1x256xf32>,
    return
  }
  func.func @transform_0(%arg0: i32, %arg1: i32) -> (i32, i32, i32) {
    %c0_i32 = arith.constant 0 : i32
    %c0_i32_0 = arith.constant 0 : i32
    return %arg0, %c0_i32, %arg1 : i32, i32, i32
  }
  func.func @transform_1(%arg0: i32, %arg1: i32) -> (i32, i32) {
    %c0_i32 = arith.constant 0 : i32
    %c0_i32_0 = arith.constant 0 : i32
    %c0_i32_1 = arith.constant 0 : i32
    return %c0_i32, %c0_i32_0 : i32, i32
  }
  func.func @transform_2(%arg0: i32, %arg1: i32) -> i32 {
    %c0_i32 = arith.constant 0 : i32
    %c0_i32_0 = arith.constant 0 : i32
    return %c0_i32 : i32
  }
  func.func @transform_3(%arg0: i32, %arg1: i32) -> (i32, i32, i32) {
    %c0_i32 = arith.constant 0 : i32
    %c0_i32_0 = arith.constant 0 : i32
    return %arg0, %c0_i32, %arg1 : i32, i32, i32
  }
}

</mosaic_0001>

<llo_original>
// kernel: tpu_custom_call.1
$region0: #{tpu_custom_call.1}
  #allocation0 [shape = 'u32[]', space=smem, size = 0x4, offset = 0x4, fixed_abs, tag = 'smem constant byte address 0x4 - core index']
  #allocation1 [shape = 'u32[144,128]{1,0:T(1,128)}', space=vmem, size = 0x12000, scoped, tag = 'internal scratch']
  #allocation2 [shape = 'f32[1]{0:T(128)S(6)}', space=smem, size = 0x200, scoped, tag = 'scoped memory for tpu_custom_call.1']
  %s0 = inlined_call_operand.hbm [shape: f32[2,24,256], index: 0, kind: input, shape index: {}]
  %s1 = inlined_call_operand.vmem [shape: f32[24,1], index: 1, kind: input, shape index: {}]
  %s2 = inlined_call_operand.<no memory space> [shape: f32[1], index: 2, kind: input, shape index: {}]
  %s3 = inlined_call_operand.hbm [shape: f32[2,1,256], index: 3, kind: output, shape index: {}]
  %s4 = sld [smem:[#allocation0]]
  $region26: #{tpu_custom_call.1} parent=0
    _
  %s6 = ssub.s32 1, %s4
  %s7 = scalar_select 0, %s6, %s4
  %8 = sst [smem:[#allocation2]] %s2
  $region1: #{tpu_custom_call.1} parent=0
    #allocation3 [shape = 'u8[49152]{0}', space=vmem, size = 0xc000, scoped, tag = 'input window, operand 0, single buffered']
    #allocation4 [shape = 's32[1]{0}', space=sflag, size = 0x4, scoped, tag = 'scoped memory for tpu_custom_call.1']
    #allocation5 [shape = 's32[1]{0}', space=sflag, size = 0x4, scoped, tag = 'scoped memory for tpu_custom_call.1']
    #allocation6 [shape = 'u8[2048]{0}', space=vmem, size = 0x800, scoped, tag = 'output window, operand 0, single buffered']
    %9 = vsyncpa [#allocation4], 0
    %10 = vsyncpa [#allocation5], 0
    // Predicated region
    $region2: #{tpu_custom_call.1} parent=1 // pred_check
      _
    $region3: #{tpu_custom_call.1} parent=1 // pred_check_branch
      %12 = sbr.rel (0) target = $region5
    $region4: #{tpu_custom_call.1} parent=1 // pred_region
      %s14 = ssub.s32 1536, 1536
      %15 = vsyncadd [#allocation4], %s14
      %s16 = sshll.u32 [#allocation3], 4
      %s17 = int_to_ptr.vmem [resolvable:$true] %s16
      %22 = dma.hbm_to_vmem [thread:$0]  %s0, 1536, %s17, [#allocation4], 256, 256, 16
    $region5: #{tpu_custom_call.1} parent=1 // pred_fallthru
      _
    // Predicated region
    $region6: #{tpu_custom_call.1} parent=1 // pred_check
      _
    $region7: #{tpu_custom_call.1} parent=1 // pred_check_branch
      %24 = sbr.rel (0) target = $region9
    $region8: #{tpu_custom_call.1} parent=1 // pred_region
      _
    $region9: #{tpu_custom_call.1} parent=1 // pred_fallthru
      _
    // Predicated region
    $region10: #{tpu_custom_call.1} parent=1 // pred_check
      _
    $region11: #{tpu_custom_call.1} parent=1 // pred_check_branch
      %26 = sbr.rel (0) target = $region13
    $region12: #{tpu_custom_call.1} parent=1 // pred_region
      _
    $region13: #{tpu_custom_call.1} parent=1 // pred_fallthru
      _
    // Predicated region
    $region14: #{tpu_custom_call.1} parent=1 // pred_check
      _
    $region15: #{tpu_custom_call.1} parent=1 // pred_check_branch
      %28 = sbr.rel (0) target = $region17
    $region16: #{tpu_custom_call.1} parent=1 // pred_region
      %29 = dma.done [#allocation4], 1536
    $region17: #{tpu_custom_call.1} parent=1 // pred_fallthru
      _
    %v30 = vld [vmem:[#allocation3] sm:$0xff]
    %v31 = vld [vmem:[#allocation3 + $0x8] sm:$0xff]
    %v32 = vld [vmem:[#allocation3 + $0x10] sm:$0xff]
    %v33 = vld [vmem:[#allocation3 + $0x18] sm:$0xff]
    %v34 = vld [vmem:[#allocation3 + $0x20] sm:$0xff]
    %v35 = vld [vmem:[#allocation3 + $0x28] sm:$0xff]
    %v36 = vld [vmem:[#allocation3 + $0x30] sm:$0xff]
    %v37 = vld [vmem:[#allocation3 + $0x38] sm:$0xff]
    %v38 = vld [vmem:[#allocation3 + $0x40] sm:$0xff]
    %v39 = vld [vmem:[#allocation3 + $0x48] sm:$0xff]
    %v40 = vld [vmem:[#allocation3 + $0x50] sm:$0xff]
    %v41 = vld [vmem:[#allocation3 + $0x58] sm:$0xff]
    %v42 = vmax.f32 %v30, 0.0
    %v43 = vmax.f32 %v31, 0.0
    %v44 = vmax.f32 %v32, 0.0
    %v45 = vmax.f32 %v33, 0.0
    %v46 = vmax.f32 %v34, 0.0
    %v47 = vmax.f32 %v35, 0.0
    %v48 = vmax.f32 %v36, 0.0
    %v49 = vmax.f32 %v37, 0.0
    %v50 = vmax.f32 %v38, 0.0
    %v51 = vmax.f32 %v39, 0.0
    %v52 = vmax.f32 %v40, 0.0
    %v53 = vmax.f32 %v41, 0.0
    %v54 = vld [vmem:[%s1] sm:$0xff]
    %v55 = vld [vmem:[%s1 + $0x8] sm:$0xff]
    %v56 = vld [vmem:[%s1 + $0x10] sm:$0xff]
    %58 = vset.pattern.permute.xlu0 0
    %59 = vperm.xlu0 %58, %v54
    %v60 = vpop.permute.xlu0 %59
    %63 = vset.pattern.permute.xlu0 0
    %64 = vperm.xlu0 %63, %v55
    %v65 = vpop.permute.xlu0 %64
    %68 = vset.pattern.permute.xlu0 0
    %69 = vperm.xlu0 %68, %v56
    %v70 = vpop.permute.xlu0 %69
    %v72 = vmul.f32 %v42, %v60
    %v73 = vmul.f32 %v43, %v60
    %v74 = vmul.f32 %v44, %v65
    %v75 = vmul.f32 %v45, %v65
    %v76 = vmul.f32 %v46, %v70
    %v77 = vmul.f32 %v47, %v70
    %v78 = vmul.f32 %v48, %v60
    %v79 = vmul.f32 %v49, %v60
    %v80 = vmul.f32 %v50, %v65
    %v81 = vmul.f32 %v51, %v65
    %v82 = vmul.f32 %v52, %v70
    %v83 = vmul.f32 %v53, %v70
    %v84 = vadd.f32 %v72, %v74
    %v85 = vadd.f32 %v84, %v76
    %v86 = vrot.slane %v85, 4
    %v87 = vadd.f32 %v85, %v86
    %v88 = vrot.slane %v87, 2
    %v89 = vadd.f32 %v87, %v88
    %v90 = vrot.slane %v89, 1
    %v91 = vadd.f32 %v89, %v90
    %v92 = vadd.f32 %v73, %v75
    %v93 = vadd.f32 %v92, %v77
    %v94 = vrot.slane %v93, 4
    %v95 = vadd.f32 %v93, %v94
    %v96 = vrot.slane %v95, 2
    %v97 = vadd.f32 %v95, %v96
    %v98 = vrot.slane %v97, 1
    %v99 = vadd.f32 %v97, %v98
    %v100 = vadd.f32 %v78, %v80
    %v101 = vadd.f32 %v100, %v82
    %v102 = vrot.slane %v101, 4
    %v103 = vadd.f32 %v101, %v102
    %v104 = vrot.slane %v103, 2
    %v105 = vadd.f32 %v103, %v104
    %v106 = vrot.slane %v105, 1
    %v107 = vadd.f32 %v105, %v106
    %v108 = vadd.f32 %v79, %v81
    %v109 = vadd.f32 %v108, %v83
    %v110 = vrot.slane %v109, 4
    %v111 = vadd.f32 %v109, %v110
    %v112 = vrot.slane %v111, 2
    %v113 = vadd.f32 %v111, %v112
    %v114 = vrot.slane %v113, 1
    %v115 = vadd.f32 %v113, %v114
    %s116 = sld [smem:[#allocation2]]
    %v117 = vstv %s116
    %v118 = vadd.f32 %v91, %v117
    %v119 = vadd.f32 %v99, %v117
    %v120 = vadd.f32 %v107, %v117
    %v121 = vadd.f32 %v115, %v117
    %v126 = vcombine.low %v118, %v119
    %v128 = vunpack.c.l.s4 1966171168
    %v129 = vunpack.c.0.s8 %v128
    %v130 = vlaneseq
    %v131 = vshrl.u32 %v130, 7
    %v132 = vsub.s32 %v129, %v131
    %v133 = vrot.slane %v126, %v132
    %v135 = vunpack.c.l.s4 1966171168
    %v136 = vunpack.c.0.s8 %v135
    %v137 = vlaneseq
    %v138 = vshrl.u32 %v137, 7
    %v139 = vsub.s32 %v136, %v138
    %v140 = vrot.slane %v133, %v139
    %v141 = vcombine.low %v120, %v121
    %v143 = vunpack.c.l.s4 1966171168
    %v144 = vunpack.c.0.s8 %v143
    %v145 = vlaneseq
    %v146 = vshrl.u32 %v145, 7
    %v147 = vsub.s32 %v144, %v146
    %v148 = vrot.slane %v141, %v147
    %v150 = vunpack.c.l.s4 1966171168
    %v151 = vunpack.c.0.s8 %v150
    %v152 = vlaneseq
    %v153 = vshrl.u32 %v152, 7
    %v154 = vsub.s32 %v151, %v153
    %v155 = vrot.slane %v148, %v154
    %v158 = vlaneseq
    %vm159 = vcmp.ge.s32.totalorder %v158, 0
    %vm160 = vcmp.lt.s32.totalorder %v158, 256
    %vm161 = vmand %vm159, %vm160
    %162 = vst.msk [vmem:[#allocation6] sm:$0x3] %vm161, %v140
    %163 = vst.msk [vmem:[#allocation6 + $0x2] sm:$0x3] %vm161, %v155
    // Predicated region
    $region18: #{tpu_custom_call.1} parent=1 // pred_check
      _
    $region19: #{tpu_custom_call.1} parent=1 // pred_check_branch
      %165 = sbr.rel (0) target = $region21
    $region20: #{tpu_custom_call.1} parent=1 // pred_region
      %s167 = ssub.s32 64, 64
      %168 = vsyncadd [#allocation5], %s167
      %s169 = sshll.u32 [#allocation6], 4
      %s170 = int_to_ptr.vmem [resolvable:$true] %s169
      %175 = dma.vmem_to_hbm [thread:$0]  %s170, 64, %s3, [#allocation5], 32, 32, 2
    $region21: #{tpu_custom_call.1} parent=1 // pred_fallthru
      _
    // Predicated region
    $region22: #{tpu_custom_call.1} parent=1 // pred_check
      _
    $region23: #{tpu_custom_call.1} parent=1 // pred_check_branch
      %177 = sbr.rel (0) target = $region25
    $region24: #{tpu_custom_call.1} parent=1 // pred_region
      %178 = dma.done [#allocation5], 64
    $region25: #{tpu_custom_call.1} parent=1 // pred_fallthru
      _
    %179 = vsyncpa [#allocation4], 1
    %180 = vsyncpa [#allocation5], 1

</llo_original>
